<compile_context>
chip_gen: v7x
topology: tpu7x:2x2x1
jax: 0.10.0
libtpu: 0.0.40
codegen_flags: <defaults>
</compile_context>

<pallas_src>
import jax
import jax.numpy as jnp
from jax.experimental import pallas as pl
from jax.experimental.pallas import tpu as pltpu


def _round_up(n, m):
    return (n + m - 1) // m * m


def _maybe_pad_cast(a, rows, cols, dtype):
    """Pad a 2-D array up to (rows, cols) and cast -- each only if needed."""
    if a.shape != (rows, cols):
        a = jnp.pad(a, ((0, rows - a.shape[0]), (0, cols - a.shape[1])))
    if a.dtype != dtype:
        a = a.astype(dtype)
    return a


# ---------------------------------------------------------------------------
# Stage 1:  support = x @ W        (computed once, fat row tiles)
# ---------------------------------------------------------------------------
def _support_kernel(x_ref, w_ref, s_ref):
    # x_ref: (s1_tile, F_in)   w_ref: (F_in, F_out_p)   s_ref: (s1_tile, F_out_p)
    s_ref[...] = jnp.dot(
        x_ref[...], w_ref[...], preferred_element_type=jnp.float32
    ).astype(s_ref.dtype)


# ---------------------------------------------------------------------------
# Stage 2:  output = adj @ support   (accumulate directly into resident out)
# ---------------------------------------------------------------------------
def _make_aggregate_kernel(tile_k, resident, mxu_dtype):
    def kernel(adj_ref, s_ref, out_ref):
        # adj_ref: (tile_n, tile_k)
        # s_ref:   (n_cols, F_out_p) if resident else (tile_k, F_out_p), f32
        # out_ref: (tile_n, F_out_p) f32 -- VMEM-resident across the k axis
        k = pl.program_id(1)

        @pl.when(k == 0)
        def _():
            out_ref[...] = jnp.zeros_like(out_ref)

        if resident:
            ks = pl.multiple_of(k * tile_k, tile_k)
            s_tile = s_ref[pl.ds(ks, tile_k), :]
        else:
            s_tile = s_ref[...]

        out_ref[...] += jnp.dot(
            adj_ref[...], s_tile.astype(mxu_dtype),
            preferred_element_type=jnp.float32)

    return kernel


def gcn_layer(x, weight, adj, *, tile_n=512, tile_k=512,
              mxu_dtype=jnp.bfloat16):
    """GCN layer forward: adj @ (x @ weight).  dropout p=0.0 -> identity.

    mxu_dtype: dtype of the adj HBM stream / MXU inputs for stage 2
    (bf16 default on all generations -- stage 2 is HBM-bound everywhere;
    jnp.float32 gives the exact path).  Accumulation is always f32 and
    `support` is kept f32 end-to-end.
    """
    N, f_in = x.shape
    assert weight.shape[0] == f_in
    f_out = weight.shape[1]
    assert adj.shape == (N, N)

    # Lane-dense output feature dim (>=128, multiple of 128) -> unmasked vst.
    f_out_p = _round_up(max(f_out, 128), 128)

    # Clamp tiles to the (128-padded) problem size; keeps (8,128) alignment.
    tile_n = min(tile_n, _round_up(N, 128))
    tile_k = min(tile_k, _round_up(N, 128))

    n_rows = _round_up(N, tile_n)   # adj rows / output rows
    n_cols = _round_up(N, tile_k)   # adj cols / x (and support) rows

    # Wrapper-side pad / cast -- each skipped when it is a no-op.
    adj_p = _maybe_pad_cast(adj, n_rows, n_cols, mxu_dtype)
    x_p = _maybe_pad_cast(x, n_cols, f_in, jnp.float32)
    w_p = _maybe_pad_cast(weight, f_in, f_out_p, jnp.float32)

    # ---- stage 1: support = x @ W  (few fat steps) --------------------------
    s1_tile = tile_k
    while s1_tile * 2 <= min(n_cols, 2048) and n_cols % (s1_tile * 2) == 0:
        s1_tile *= 2
    s1_vmem = (2 * s1_tile * f_in * 4          # x tiles (double-buffered)
               + 2 * f_in * f_out_p * 4        # W (constant index)
               + 2 * s1_tile * f_out_p * 4     # support tiles
               + (8 << 20))                    # headroom
    support = pl.pallas_call(
        _support_kernel,
        out_shape=jax.ShapeDtypeStruct((n_cols, f_out_p), jnp.float32),
        grid_spec=pltpu.PrefetchScalarGridSpec(
            num_scalar_prefetch=0,
            grid=(n_cols // s1_tile,),
            in_specs=[
                pl.BlockSpec((s1_tile, f_in), lambda r: (r, 0)),    # x rows
                pl.BlockSpec((f_in, f_out_p), lambda r: (0, 0)),    # W (whole)
            ],
            out_specs=pl.BlockSpec((s1_tile, f_out_p), lambda r: (r, 0)),
        ),
        compiler_params=pltpu.CompilerParams(
            dimension_semantics=("parallel",),
            vmem_limit_bytes=s1_vmem),
    )(x_p, w_p)

    # ---- stage 2: output = adj @ support ------------------------------------
    adj_bytes = jnp.dtype(mxu_dtype).itemsize
    adj_buf = 2 * tile_n * tile_k * adj_bytes       # double-buffered adj tiles
    out_buf = 2 * tile_n * f_out_p * 4              # resident/writeback out
    resident_est = 2 * n_cols * f_out_p * 4 + adj_buf + out_buf
    # Resident support only when comfortably under v7x's 64 MiB physical VMEM.
    resident = resident_est <= (40 << 20)

    if resident:
        s_spec = pl.BlockSpec((n_cols, f_out_p), lambda i, k: (0, 0))
        s2_vmem = resident_est + (8 << 20)
    else:
        s_spec = pl.BlockSpec((tile_k, f_out_p), lambda i, k: (k, 0))
        s2_vmem = 2 * tile_k * f_out_p * 4 + adj_buf + out_buf + (8 << 20)

    out_p = pl.pallas_call(
        _make_aggregate_kernel(tile_k, resident, mxu_dtype),
        out_shape=jax.ShapeDtypeStruct((n_rows, f_out_p), jnp.float32),
        grid_spec=pltpu.PrefetchScalarGridSpec(
            num_scalar_prefetch=0,
            grid=(n_rows // tile_n, n_cols // tile_k),
            in_specs=[
                # adj stream: add pipeline_mode=pl.Buffered(3) here only if a
                # profile shows exposed DMA on this stream.
                pl.BlockSpec((tile_n, tile_k), lambda i, k: (i, k)),
                s_spec,
            ],
            out_specs=pl.BlockSpec((tile_n, f_out_p), lambda i, k: (i, 0)),
        ),
        compiler_params=pltpu.CompilerParams(
            dimension_semantics=("parallel", "arbitrary"),
            vmem_limit_bytes=s2_vmem),
    )(adj_p, support)

    return out_p[:N, :f_out]


def xavier_uniform(key, fan_in, fan_out, dtype=jnp.float32):
    bound = (6.0 / (fan_in + fan_out)) ** 0.5
    return jax.random.uniform(key, (fan_in, fan_out), dtype=dtype,
                              minval=-bound, maxval=bound)


if __name__ == "__main__":
    N, F_IN, F_OUT = 256, 64, 64

    key = jax.random.PRNGKey(0)
    kx, ka, kw = jax.random.split(key, 3)

    x = jax.random.normal(kx, (N, F_IN), dtype=jnp.float32)
    # Symmetric, row-normalized dense "sparse" adjacency.
    a = (jax.random.uniform(ka, (N, N)) < 0.1).astype(jnp.float32)
    adj = a + a.T + jnp.eye(N, dtype=jnp.float32)
    adj = adj / jnp.maximum(adj.sum(axis=1, keepdims=True), 1.0)

    weight = xavier_uniform(kw, F_IN, F_OUT)
    # dropout=0.0 in the module -> identity; no RNG needed in the kernel.
    # TODO(synk): for real (sparse, large-N) graphs, replace the dense adj
    # stream with scalar-prefetched CSR offsets + gathered support blocks.

    ref = adj @ (x @ weight)

    # Exact f32 path.
    out = gcn_layer(x, weight, adj, mxu_dtype=jnp.float32)
    jax.block_until_ready(out)
    assert out.shape == (N, F_OUT)
    assert jnp.allclose(out, ref, atol=1e-5, rtol=1e-5)

    # Default bf16-adj / f32-accumulate path (halves the dominant HBM stream).
    out_bf16 = gcn_layer(x, weight, adj)
    jax.block_until_ready(out_bf16)
    assert jnp.allclose(out_bf16, ref, atol=3e-2, rtol=3e-2)

    print("KERNEL_OK")
</pallas_src>

<mosaic_0001>
module attributes {stable_mosaic.version = 11 : i64} {
  func.func @_support_kernel(%arg0: i32, %arg1: memref<256x64xf32, #tpu.memory_space<vmem>>, %arg2: memref<64x128xf32, #tpu.memory_space<vmem>>, %arg3: memref<256x128xf32, #tpu.memory_space<vmem>>) attributes {dimension_semantics = [#tpu.dimension_semantics<parallel>], iteration_bounds = array<i64: 1>, scalar_prefetch = 0 : i64, scratch_operands = 0 : i64, tpu.core_type = #tpu.core_type<tc>, window_params = [{transform_indices = @transform_0, window_bounds = array<i64: 256, 64>}, {pipeline_mode = #tpu.pipeline_mode<synchronous>, transform_indices = @transform_1, window_bounds = array<i64: 64, 128>}, {transform_indices = @transform_2, window_bounds = array<i64: 256, 128>}]} {
    %c0 = arith.constant 0 : index
    %c0_0 = arith.constant 0 : index
    %0 = vector.load %arg1[%c0, %c0_0] : memref<256x64xf32, #tpu.memory_space<vmem>>, vector<256x64xf32>
    %c0_1 = arith.constant 0 : index
    %c0_2 = arith.constant 0 : index
    %1 = vector.load %arg2[%c0_1, %c0_2] : memref<64x128xf32, #tpu.memory_space<vmem>>, vector<64x128xf32>
    %cst = arith.constant dense<0.000000e+00> : vector<256x128xf32>
    %2 = tpu.matmul %0, %1, %cst {dimension_numbers = #tpu.dot_dimension_numbers<[1], [0], [0], [1], [0, 0, 1, 1], [], []>} : vector<256x64xf32>, vector<64x128xf32>, vector<256x128xf32> -> vector<256x128xf32>
    %c0_3 = arith.constant 0 : index
    %c0_4 = arith.constant 0 : index
    %3 = vector.load %arg3[%c0_3, %c0_4] : memref<256x128xf32, #tpu.memory_space<vmem>>, vector<256x128xf32>
    tpu.vector_store %arg3[%c0_3, %c0_4], %2 {strides = array<i32>} : memref<256x128xf32, #tpu.memory_space<vmem>>, vector<256x128xf32>,
    return
  }
  func.func @transform_0(%arg0: i32) -> (i32, i32) {
    %c0_i32 = arith.constant 0 : i32
    %c0_i32_0 = arith.constant 0 : i32
    return %arg0, %c0_i32 : i32, i32
  }
  func.func @transform_1(%arg0: i32) -> (i32, i32) {
    %c0_i32 = arith.constant 0 : i32
    %c0_i32_0 = arith.constant 0 : i32
    %c0_i32_1 = arith.constant 0 : i32
    return %c0_i32, %c0_i32_0 : i32, i32
  }
  func.func @transform_2(%arg0: i32) -> (i32, i32) {
    %c0_i32 = arith.constant 0 : i32
    %c0_i32_0 = arith.constant 0 : i32
    return %arg0, %c0_i32 : i32, i32
  }
}

</mosaic_0001>

<llo_original>
// kernel: tpu_custom_call.1
$region0: #{tpu_custom_call.1}
  #allocation0 [shape = 'u32[]', space=smem, size = 0x4, offset = 0x4, fixed_abs, tag = 'smem constant byte address 0x4 - core index']
  #allocation1 [shape = 'u32[144,128]{1,0:T(1,128)}', space=vmem, size = 0x12000, scoped, tag = 'internal scratch']
  %s0 = inlined_call_operand.vmem [shape: f32[256,64], index: 0, kind: input, shape index: {}]
  %s1 = inlined_call_operand.vmem [shape: f32[64,128], index: 1, kind: input, shape index: {}]
  %s2 = inlined_call_operand.hbm [shape: f32[256,128], index: 2, kind: output, shape index: {}]
  %s3 = sld [smem:[#allocation0]]
  $region18: #{tpu_custom_call.1} parent=0
    _
  %s5 = ssub.s32 1, %s3
  %s6 = scalar_select 0, %s5, %s3
  $region1: #{tpu_custom_call.1} parent=0
    #allocation2 [shape = 'u8[131072]{0}', space=vmem, size = 0x20000, scoped, tag = 'output window, operand 0, single buffered']
    #allocation3 [shape = 's32[1]{0}', space=sflag, size = 0x4, scoped, tag = 'scoped memory for tpu_custom_call.1']
    %7 = vsyncpa [#allocation3], 0
    // Predicated region
    $region2: #{tpu_custom_call.1} parent=1 // pred_check
      _
    $region3: #{tpu_custom_call.1} parent=1 // pred_check_branch
      %9 = sbr.rel (0) target = $region5
    $region4: #{tpu_custom_call.1} parent=1 // pred_region
      _
    $region5: #{tpu_custom_call.1} parent=1 // pred_fallthru
      _
    // Predicated region
    $region6: #{tpu_custom_call.1} parent=1 // pred_check
      _
    $region7: #{tpu_custom_call.1} parent=1 // pred_check_branch
      %11 = sbr.rel (0) target = $region9
    $region8: #{tpu_custom_call.1} parent=1 // pred_region
      _
    $region9: #{tpu_custom_call.1} parent=1 // pred_fallthru
      _
    %v12 = vld [vmem:[%s0] sm:$0xff]
    %v13 = vld [vmem:[%s0 + $0x8] sm:$0xff]
    %v14 = vld [vmem:[%s0 + $0x10] sm:$0xff]
    %v15 = vld [vmem:[%s0 + $0x18] sm:$0xff]
    %v16 = vld [vmem:[%s0 + $0x20] sm:$0xff]
    %v17 = vld [vmem:[%s0 + $0x28] sm:$0xff]
    %v18 = vld [vmem:[%s0 + $0x30] sm:$0xff]
    %v19 = vld [vmem:[%s0 + $0x38] sm:$0xff]
    %v20 = vld [vmem:[%s0 + $0x40] sm:$0xff]
    %v21 = vld [vmem:[%s0 + $0x48] sm:$0xff]
    %v22 = vld [vmem:[%s0 + $0x50] sm:$0xff]
    %v23 = vld [vmem:[%s0 + $0x58] sm:$0xff]
    %v24 = vld [vmem:[%s0 + $0x60] sm:$0xff]
    %v25 = vld [vmem:[%s0 + $0x68] sm:$0xff]
    %v26 = vld [vmem:[%s0 + $0x70] sm:$0xff]
    %v27 = vld [vmem:[%s0 + $0x78] sm:$0xff]
    %v28 = vld [vmem:[%s0 + $0x80] sm:$0xff]
    %v29 = vld [vmem:[%s0 + $0x88] sm:$0xff]
    %v30 = vld [vmem:[%s0 + $0x90] sm:$0xff]
    %v31 = vld [vmem:[%s0 + $0x98] sm:$0xff]
    %v32 = vld [vmem:[%s0 + $0xa0] sm:$0xff]
    %v33 = vld [vmem:[%s0 + $0xa8] sm:$0xff]
    %v34 = vld [vmem:[%s0 + $0xb0] sm:$0xff]
    %v35 = vld [vmem:[%s0 + $0xb8] sm:$0xff]
    %v36 = vld [vmem:[%s0 + $0xc0] sm:$0xff]
    %v37 = vld [vmem:[%s0 + $0xc8] sm:$0xff]
    %v38 = vld [vmem:[%s0 + $0xd0] sm:$0xff]
    %v39 = vld [vmem:[%s0 + $0xd8] sm:$0xff]
    %v40 = vld [vmem:[%s0 + $0xe0] sm:$0xff]
    %v41 = vld [vmem:[%s0 + $0xe8] sm:$0xff]
    %v42 = vld [vmem:[%s0 + $0xf0] sm:$0xff]
    %v43 = vld [vmem:[%s0 + $0xf8] sm:$0xff]
    %v44 = vld [vmem:[%s1] sm:$0xff]
    %v45 = vld [vmem:[%s1 + $0x8] sm:$0xff]
    %v46 = vld [vmem:[%s1 + $0x10] sm:$0xff]
    %v47 = vld [vmem:[%s1 + $0x18] sm:$0xff]
    %v48 = vld [vmem:[%s1 + $0x20] sm:$0xff]
    %v49 = vld [vmem:[%s1 + $0x28] sm:$0xff]
    %v50 = vld [vmem:[%s1 + $0x30] sm:$0xff]
    %v51 = vld [vmem:[%s1 + $0x38] sm:$0xff]
    %vm52 = vcmask 523264
    %v54 = vsel %vm52, %v12, 0
    %v57 = vsel %vm52, %v13, 0
    %v60 = vsel %vm52, %v14, 0
    %v63 = vsel %vm52, %v15, 0
    %v66 = vsel %vm52, %v16, 0
    %v69 = vsel %vm52, %v17, 0
    %v72 = vsel %vm52, %v18, 0
    %v75 = vsel %vm52, %v19, 0
    %v78 = vsel %vm52, %v20, 0
    %v81 = vsel %vm52, %v21, 0
    %v84 = vsel %vm52, %v22, 0
    %v87 = vsel %vm52, %v23, 0
    %v90 = vsel %vm52, %v24, 0
    %v93 = vsel %vm52, %v25, 0
    %v96 = vsel %vm52, %v26, 0
    %v99 = vsel %vm52, %v27, 0
    %v102 = vsel %vm52, %v28, 0
    %v105 = vsel %vm52, %v29, 0
    %v108 = vsel %vm52, %v30, 0
    %v111 = vsel %vm52, %v31, 0
    %v114 = vsel %vm52, %v32, 0
    %v117 = vsel %vm52, %v33, 0
    %v120 = vsel %vm52, %v34, 0
    %v123 = vsel %vm52, %v35, 0
    %v126 = vsel %vm52, %v36, 0
    %v129 = vsel %vm52, %v37, 0
    %v132 = vsel %vm52, %v38, 0
    %v135 = vsel %vm52, %v39, 0
    %v138 = vsel %vm52, %v40, 0
    %v141 = vsel %vm52, %v41, 0
    %v144 = vsel %vm52, %v42, 0
    %v147 = vsel %vm52, %v43, 0
    %149 = vmatprep.subr.mxu0 0.0
    %150 = vmatpush1.msra.mxu0 %v44
    %151 = vmatprep.subr.mxu0 0.0
    %152 = vmatpush1.msra.mxu0 %v45
    %153 = vmatprep.subr.mxu0 0.0
    %154 = vmatpush1.msra.mxu0 %v46
    %155 = vmatprep.subr.mxu0 0.0
    %156 = vmatpush1.msra.mxu0 %v47
    %157 = vmatprep.subr.mxu0 0.0
    %158 = vmatpush1.msra.mxu0 %v48
    %159 = vmatprep.subr.mxu0 0.0
    %160 = vmatpush1.msra.mxu0 %v49
    %161 = vmatprep.subr.mxu0 0.0
    %162 = vmatpush1.msra.mxu0 %v50
    %163 = vmatprep.subr.mxu0 0.0
    %164 = vmatpush1.msra.mxu0 %v51
    %165 = vmatprep.subr.mxu0 0.0
    %166 = vmatpush1.msra.mxu0 0.0
    %167 = vmatprep.subr.mxu0 0.0
    %168 = vmatpush1.msra.mxu0 0.0
    %169 = vmatprep.subr.mxu0 0.0
    %170 = vmatpush1.msra.mxu0 0.0
    %171 = vmatprep.subr.mxu0 0.0
    %172 = vmatpush1.msra.mxu0 0.0
    %173 = vmatprep.subr.mxu0 0.0
    %174 = vmatpush1.msra.mxu0 0.0
    %175 = vmatprep.subr.mxu0 0.0
    %176 = vmatpush1.msra.mxu0 0.0
    %177 = vmatprep.subr.mxu0 0.0
    %178 = vmatpush1.msra.mxu0 0.0
    %179 = vmatprep.subr.mxu0 0.0
    %180 = vmatpush1.msra.mxu0 0.0
    %181 = vmatprep.subr.mxu0 0.0
    %182 = vmatpush1.msra.mxu0 0.0
    %183 = vmatprep.subr.mxu0 0.0
    %184 = vmatpush1.msra.mxu0 0.0
    %185 = vmatprep.subr.mxu0 0.0
    %186 = vmatpush1.msra.mxu0 0.0
    %187 = vmatprep.subr.mxu0 0.0
    %188 = vmatpush1.msra.mxu0 0.0
    %189 = vmatprep.subr.mxu0 0.0
    %190 = vmatpush1.msra.mxu0 0.0
    %191 = vmatprep.subr.mxu0 0.0
    %192 = vmatpush1.msra.mxu0 0.0
    %193 = vmatprep.subr.mxu0 0.0
    %194 = vmatpush1.msra.mxu0 0.0
    %195 = vmatprep.subr.mxu0 0.0
    %196 = vmatpush1.msra.mxu0 0.0
    %197 = vmatprep.subr.mxu0 0.0
    %198 = vmatpush1.msra.mxu0 0.0
    %199 = vmatprep.subr.mxu0 0.0
    %200 = vmatpush1.msra.mxu0 0.0
    %201 = vmatprep.subr.mxu0 0.0
    %202 = vmatpush1.msra.mxu0 0.0
    %203 = vmatprep.subr.mxu0 0.0
    %204 = vmatpush1.msra.mxu0 0.0
    %205 = vmatprep.subr.mxu0 0.0
    %206 = vmatpush1.msra.mxu0 0.0
    %207 = vmatprep.subr.mxu0 0.0
    %208 = vmatpush1.msra.mxu0 0.0
    %209 = vmatprep.subr.mxu0 0.0
    %210 = vmatpush1.msra.mxu0 0.0
    %211 = vmatprep.subr.mxu0 0.0
    %212 = vmatpush1.msra.mxu0 0.0
    %213 = vmatprep.mubr.f32.mxu0 0.0
    %214 = vmatmul.mubr.f32.gmra.mrb[0].mxu0 %v54
    %v215 = vpop.f32.mrb[0].mxu0
    %v216 = vadd.f32 0.0, %v215
    %v217 = vpop.f32.mrb[0].mxu0
    %218 = vmatprep.mubr.f32.mxu0 0.0
    %219 = vmatmul.mubr.f32.gmra.mrb[0].mxu0 %v57
    %v220 = vpop.f32.mrb[0].mxu0
    %v221 = vadd.f32 0.0, %v220
    %v222 = vpop.f32.mrb[0].mxu0
    %223 = vmatprep.mubr.f32.mxu0 0.0
    %224 = vmatmul.mubr.f32.gmra.mrb[0].mxu0 %v60
    %v225 = vpop.f32.mrb[0].mxu0
    %v226 = vadd.f32 0.0, %v225
    %v227 = vpop.f32.mrb[0].mxu0
    %228 = vmatprep.mubr.f32.mxu0 0.0
    %229 = vmatmul.mubr.f32.gmra.mrb[0].mxu0 %v63
    %v230 = vpop.f32.mrb[0].mxu0
    %v231 = vadd.f32 0.0, %v230
    %v232 = vpop.f32.mrb[0].mxu0
    %233 = vmatprep.mubr.f32.mxu0 0.0
    %234 = vmatmul.mubr.f32.gmra.mrb[0].mxu0 %v66
    %v235 = vpop.f32.mrb[0].mxu0
    %v236 = vadd.f32 0.0, %v235
    %v237 = vpop.f32.mrb[0].mxu0
    %238 = vmatprep.mubr.f32.mxu0 0.0
    %239 = vmatmul.mubr.f32.gmra.mrb[0].mxu0 %v69
    %v240 = vpop.f32.mrb[0].mxu0
    %v241 = vadd.f32 0.0, %v240
    %v242 = vpop.f32.mrb[0].mxu0
    %243 = vmatprep.mubr.f32.mxu0 0.0
    %244 = vmatmul.mubr.f32.gmra.mrb[0].mxu0 %v72
    %v245 = vpop.f32.mrb[0].mxu0
    %v246 = vadd.f32 0.0, %v245
    %v247 = vpop.f32.mrb[0].mxu0
    %248 = vmatprep.mubr.f32.mxu0 0.0
    %249 = vmatmul.mubr.f32.gmra.mrb[0].mxu0 %v75
    %v250 = vpop.f32.mrb[0].mxu0
    %v251 = vadd.f32 0.0, %v250
    %v252 = vpop.f32.mrb[0].mxu0
    %253 = vmatprep.mubr.f32.mxu0 0.0
    %254 = vmatmul.mubr.f32.gmra.mrb[0].mxu0 %v78
    %v255 = vpop.f32.mrb[0].mxu0
    %v256 = vadd.f32 0.0, %v255
    %v257 = vpop.f32.mrb[0].mxu0
    %258 = vmatprep.mubr.f32.mxu0 0.0
    %259 = vmatmul.mubr.f32.gmra.mrb[0].mxu0 %v81
    %v260 = vpop.f32.mrb[0].mxu0
    %v261 = vadd.f32 0.0, %v260
    %v262 = vpop.f32.mrb[0].mxu0
    %263 = vmatprep.mubr.f32.mxu0 0.0
    %264 = vmatmul.mubr.f32.gmra.mrb[0].mxu0 %v84
    %v265 = vpop.f32.mrb[0].mxu0
    %v266 = vadd.f32 0.0, %v265
    %v267 = vpop.f32.mrb[0].mxu0
    %268 = vmatprep.mubr.f32.mxu0 0.0
    %269 = vmatmul.mubr.f32.gmra.mrb[0].mxu0 %v87
    %v270 = vpop.f32.mrb[0].mxu0
    %v271 = vadd.f32 0.0, %v270
    %v272 = vpop.f32.mrb[0].mxu0
    %273 = vmatprep.mubr.f32.mxu0 0.0
    %274 = vmatmul.mubr.f32.gmra.mrb[0].mxu0 %v90
    %v275 = vpop.f32.mrb[0].mxu0
    %v276 = vadd.f32 0.0, %v275
    %v277 = vpop.f32.mrb[0].mxu0
    %278 = vmatprep.mubr.f32.mxu0 0.0
    %279 = vmatmul.mubr.f32.gmra.mrb[0].mxu0 %v93
    %v280 = vpop.f32.mrb[0].mxu0
    %v281 = vadd.f32 0.0, %v280
    %v282 = vpop.f32.mrb[0].mxu0
    %283 = vmatprep.mubr.f32.mxu0 0.0
    %284 = vmatmul.mubr.f32.gmra.mrb[0].mxu0 %v96
    %v285 = vpop.f32.mrb[0].mxu0
    %v286 = vadd.f32 0.0, %v285
    %v287 = vpop.f32.mrb[0].mxu0
    %288 = vmatprep.mubr.f32.mxu0 0.0
    %289 = vmatmul.mubr.f32.gmra.mrb[0].mxu0 %v99
    %v290 = vpop.f32.mrb[0].mxu0
    %v291 = vadd.f32 0.0, %v290
    %v292 = vpop.f32.mrb[0].mxu0
    %293 = vmatprep.mubr.f32.mxu0 0.0
    %294 = vmatmul.mubr.f32.gmra.mrb[0].mxu0 %v102
    %v295 = vpop.f32.mrb[0].mxu0
    %v296 = vadd.f32 0.0, %v295
    %v297 = vpop.f32.mrb[0].mxu0
    %298 = vmatprep.mubr.f32.mxu0 0.0
    %299 = vmatmul.mubr.f32.gmra.mrb[0].mxu0 %v105
    %v300 = vpop.f32.mrb[0].mxu0
    %v301 = vadd.f32 0.0, %v300
    %v302 = vpop.f32.mrb[0].mxu0
    %303 = vmatprep.mubr.f32.mxu0 0.0
    %304 = vmatmul.mubr.f32.gmra.mrb[0].mxu0 %v108
    %v305 = vpop.f32.mrb[0].mxu0
    %v306 = vadd.f32 0.0, %v305
    %v307 = vpop.f32.mrb[0].mxu0
    %308 = vmatprep.mubr.f32.mxu0 0.0
    %309 = vmatmul.mubr.f32.gmra.mrb[0].mxu0 %v111
    %v310 = vpop.f32.mrb[0].mxu0
    %v311 = vadd.f32 0.0, %v310
    %v312 = vpop.f32.mrb[0].mxu0
    %313 = vmatprep.mubr.f32.mxu0 0.0
    %314 = vmatmul.mubr.f32.gmra.mrb[0].mxu0 %v114
    %v315 = vpop.f32.mrb[0].mxu0
    %v316 = vadd.f32 0.0, %v315
    %v317 = vpop.f32.mrb[0].mxu0
    %318 = vmatprep.mubr.f32.mxu0 0.0
    %319 = vmatmul.mubr.f32.gmra.mrb[0].mxu0 %v117
    %v320 = vpop.f32.mrb[0].mxu0
    %v321 = vadd.f32 0.0, %v320
    %v322 = vpop.f32.mrb[0].mxu0
    %323 = vmatprep.mubr.f32.mxu0 0.0
    %324 = vmatmul.mubr.f32.gmra.mrb[0].mxu0 %v120
    %v325 = vpop.f32.mrb[0].mxu0
    %v326 = vadd.f32 0.0, %v325
    %v327 = vpop.f32.mrb[0].mxu0
    %328 = vmatprep.mubr.f32.mxu0 0.0
    %329 = vmatmul.mubr.f32.gmra.mrb[0].mxu0 %v123
    %v330 = vpop.f32.mrb[0].mxu0
    %v331 = vadd.f32 0.0, %v330
    %v332 = vpop.f32.mrb[0].mxu0
    %333 = vmatprep.mubr.f32.mxu0 0.0
    %334 = vmatmul.mubr.f32.gmra.mrb[0].mxu0 %v126
    %v335 = vpop.f32.mrb[0].mxu0
    %v336 = vadd.f32 0.0, %v335
    %v337 = vpop.f32.mrb[0].mxu0
    %338 = vmatprep.mubr.f32.mxu0 0.0
    %339 = vmatmul.mubr.f32.gmra.mrb[0].mxu0 %v129
    %v340 = vpop.f32.mrb[0].mxu0
    %v341 = vadd.f32 0.0, %v340
    %v342 = vpop.f32.mrb[0].mxu0
    %343 = vmatprep.mubr.f32.mxu0 0.0
    %344 = vmatmul.mubr.f32.gmra.mrb[0].mxu0 %v132
    %v345 = vpop.f32.mrb[0].mxu0
    %v346 = vadd.f32 0.0, %v345
    %v347 = vpop.f32.mrb[0].mxu0
    %348 = vmatprep.mubr.f32.mxu0 0.0
    %349 = vmatmul.mubr.f32.gmra.mrb[0].mxu0 %v135
    %v350 = vpop.f32.mrb[0].mxu0
    %v351 = vadd.f32 0.0, %v350
    %v352 = vpop.f32.mrb[0].mxu0
    %353 = vmatprep.mubr.f32.mxu0 0.0
    %354 = vmatmul.mubr.f32.gmra.mrb[0].mxu0 %v138
    %v355 = vpop.f32.mrb[0].mxu0
    %v356 = vadd.f32 0.0, %v355
    %v357 = vpop.f32.mrb[0].mxu0
    %358 = vmatprep.mubr.f32.mxu0 0.0
    %359 = vmatmul.mubr.f32.gmra.mrb[0].mxu0 %v141
    %v360 = vpop.f32.mrb[0].mxu0
    %v361 = vadd.f32 0.0, %v360
    %v362 = vpop.f32.mrb[0].mxu0
    %363 = vmatprep.mubr.f32.mxu0 0.0
    %364 = vmatmul.mubr.f32.gmra.mrb[0].mxu0 %v144
    %v365 = vpop.f32.mrb[0].mxu0
    %v366 = vadd.f32 0.0, %v365
    %v367 = vpop.f32.mrb[0].mxu0
    %368 = vmatprep.mubr.f32.mxu0 0.0
    %369 = vmatmul.mubr.f32.gmra.mrb[0].mxu0 %v147
    %v370 = vpop.f32.mrb[0].mxu0
    %v371 = vadd.f32 0.0, %v370
    %v372 = vpop.f32.mrb[0].mxu0
    %373 = vdwg.mxu0
    %374 = vst [vmem:[#allocation2] sm:$0xff] %v216
    %375 = vst [vmem:[#allocation2 + $0x8] sm:$0xff] %v221
    %376 = vst [vmem:[#allocation2 + $0x10] sm:$0xff] %v226
    %377 = vst [vmem:[#allocation2 + $0x18] sm:$0xff] %v231
    %378 = vst [vmem:[#allocation2 + $0x20] sm:$0xff] %v236
    %379 = vst [vmem:[#allocation2 + $0x28] sm:$0xff] %v241
    %380 = vst [vmem:[#allocation2 + $0x30] sm:$0xff] %v246
    %381 = vst [vmem:[#allocation2 + $0x38] sm:$0xff] %v251
    %382 = vst [vmem:[#allocation2 + $0x40] sm:$0xff] %v256
    %383 = vst [vmem:[#allocation2 + $0x48] sm:$0xff] %v261
    %384 = vst [vmem:[#allocation2 + $0x50] sm:$0xff] %v266
    %385 = vst [vmem:[#allocation2 + $0x58] sm:$0xff] %v271
    %386 = vst [vmem:[#allocation2 + $0x60] sm:$0xff] %v276
    %387 = vst [vmem:[#allocation2 + $0x68] sm:$0xff] %v281
    %388 = vst [vmem:[#allocation2 + $0x70] sm:$0xff] %v286
    %389 = vst [vmem:[#allocation2 + $0x78] sm:$0xff] %v291
    %390 = vst [vmem:[#allocation2 + $0x80] sm:$0xff] %v296
    %391 = vst [vmem:[#allocation2 + $0x88] sm:$0xff] %v301
    %392 = vst [vmem:[#allocation2 + $0x90] sm:$0xff] %v306
    %393 = vst [vmem:[#allocation2 + $0x98] sm:$0xff] %v311
    %394 = vst [vmem:[#allocation2 + $0xa0] sm:$0xff] %v316
    %395 = vst [vmem:[#allocation2 + $0xa8] sm:$0xff] %v321
    %396 = vst [vmem:[#allocation2 + $0xb0] sm:$0xff] %v326
    %397 = vst [vmem:[#allocation2 + $0xb8] sm:$0xff] %v331
    %398 = vst [vmem:[#allocation2 + $0xc0] sm:$0xff] %v336
    %399 = vst [vmem:[#allocation2 + $0xc8] sm:$0xff] %v341
    %400 = vst [vmem:[#allocation2 + $0xd0] sm:$0xff] %v346
    %401 = vst [vmem:[#allocation2 + $0xd8] sm:$0xff] %v351
    %402 = vst [vmem:[#allocation2 + $0xe0] sm:$0xff] %v356
    %403 = vst [vmem:[#allocation2 + $0xe8] sm:$0xff] %v361
    %404 = vst [vmem:[#allocation2 + $0xf0] sm:$0xff] %v366
    %405 = vst [vmem:[#allocation2 + $0xf8] sm:$0xff] %v371
    // Predicated region
    $region10: #{tpu_custom_call.1} parent=1 // pred_check
      _
    $region11: #{tpu_custom_call.1} parent=1 // pred_check_branch
      %407 = sbr.rel (0) target = $region13
    $region12: #{tpu_custom_call.1} parent=1 // pred_region
      %s409 = ssub.s32 4096, 4096
      %410 = vsyncadd [#allocation3], %s409
      %s411 = sshll.u32 [#allocation2], 4
      %s412 = int_to_ptr.vmem [resolvable:$true] %s411
      %417 = dma.vmem_to_hbm [thread:$0]  %s412, 4096, %s2, [#allocation3], 128, 128, 8
    $region13: #{tpu_custom_call.1} parent=1 // pred_fallthru
      _
    // Predicated region
    $region14: #{tpu_custom_call.1} parent=1 // pred_check
      _
    $region15: #{tpu_custom_call.1} parent=1 // pred_check_branch
      %419 = sbr.rel (0) target = $region17
    $region16: #{tpu_custom_call.1} parent=1 // pred_region
      %420 = dma.done [#allocation3], 4096
    $region17: #{tpu_custom_call.1} parent=1 // pred_fallthru
      _
    %421 = vsyncpa [#allocation3], 1

</llo_original>
